<compile_context>
chip_gen: v6e
topology: v6e:2x2x1
jax: 0.10.0
libtpu: 0.0.40
codegen_flags: <defaults>
</compile_context>

<pallas_src>
import functools
import math

import jax
import jax.numpy as jnp
from jax.experimental import pallas as pl
from jax.experimental.pallas import tpu as pltpu


def _round_up(x, n):
    return ((x + n - 1) // n) * n


def _vmem_capacity_bytes():
    """Per-TensorCore VMEM capacity; conservative 64 MiB fallback (v7x)."""
    try:
        info = pltpu.get_tpu_info()
        cap = int(getattr(info, "vmem_capacity_bytes", 0) or 0)
        if cap > 0:
            return cap
    except Exception:
        pass
    return 64 << 20


def _pick_tile(total, candidates):
    """Largest candidate that divides `total` (total is a multiple of 128)."""
    for c in candidates:
        if c <= total and total % c == 0:
            return c
    return 128


def _footprint_bytes(tm, tk, tn, n_k, n_n, dbytes):
    """VMEM bytes needed by the kernel buffers for a given tiling."""
    w_bufs = 1 if (n_k == 1 and n_n == 1) else 2   # resident weight: single buffer
    b_bufs = 1 if n_n == 1 else 2
    f = 2 * tm * tk * dbytes                        # x (double buffered)
    f += w_bufs * tk * 2 * tn * dbytes              # fused [Wl|Wr] block
    f += b_bufs * 2 * tn * dbytes                   # fused bias block
    f += 2 * tm * tn * dbytes                       # output (double buffered)
    if n_k > 1:
        f += tm * 2 * tn * 4                        # f32 accumulator scratch
    return f


# ---------------------------------------------------------------------------
# Kernels
# ---------------------------------------------------------------------------
def _glu_kernel_noacc(x_ref, w_ref, b_ref, o_ref, *, tn):
    """Full-K tile: single MXU matmul, bias + sigmoid gate, direct store."""
    y = jnp.dot(x_ref[...], w_ref[...], preferred_element_type=jnp.float32)
    y = y + b_ref[...].astype(jnp.float32)
    left = y[:, :tn]                      # static, 128-aligned lane split
    right = y[:, tn:]
    o_ref[...] = (left * jax.nn.sigmoid(right)).astype(o_ref.dtype)


def _glu_kernel_acc(x_ref, w_ref, b_ref, o_ref, acc_ref, *, tn):
    """K-tiled path.  grid = (M, N, K), K last ('arbitrary')."""
    k = pl.program_id(2)
    prod = jnp.dot(x_ref[...], w_ref[...], preferred_element_type=jnp.float32)

    @pl.when(k == 0)
    def _():
        acc_ref[...] = prod               # first-iteration assign (no zero init)

    @pl.when(k > 0)
    def _():
        acc_ref[...] += prod

    @pl.when(k == pl.num_programs(2) - 1)
    def _():
        y = acc_ref[...] + b_ref[...].astype(jnp.float32)
        left = y[:, :tn]
        right = y[:, tn:]
        o_ref[...] = (left * jax.nn.sigmoid(right)).astype(o_ref.dtype)


# ---------------------------------------------------------------------------
# Wrapper
# ---------------------------------------------------------------------------
def make_glu(w_left, b_left, w_right, b_right, *, max_tm=512,
             cast_to_bf16=False, force_tk=None, force_tn=None,
             vmem_capacity=None):
    """Precompute fused/padded parameters + tiling once; return glu(x) closure.

    w_*: (Cin, Cout), b_*: (Cout,).  glu(x): [..., Cin] -> [..., Cout].
    """
    cin, cout = w_left.shape
    param_dtype = w_left.dtype
    compute_dtype = jnp.bfloat16 if cast_to_bf16 else param_dtype
    dbytes = jnp.dtype(compute_dtype).itemsize
    sub = 16 if compute_dtype == jnp.bfloat16 else 8

    cin_p = _round_up(cin, 128)
    cout_p = _round_up(cout, 128)

    cap = vmem_capacity if vmem_capacity is not None else _vmem_capacity_bytes()
    budget = max(cap - (16 << 20), 16 << 20)   # leave headroom for compiler scratch

    # ---- tile selection (largest-first; shrink tm only if nothing fits) ----
    tm = _round_up(min(max_tm, 512), sub)
    if force_tk is not None or force_tn is not None:
        tk = _round_up(force_tk if force_tk is not None else cin_p, 128)
        tn = _round_up(force_tn if force_tn is not None else cout_p, 128)
        cin_p = _round_up(cin_p, tk)
        cout_p = _round_up(cout_p, tn)
    else:
        while True:
            if _footprint_bytes(tm, cin_p, cout_p, 1, 1, dbytes) <= budget:
                tk, tn = cin_p, cout_p            # fully resident fused weight
                break
            tk_c = _pick_tile(cin_p, (2048, 1024, 512, 256, 128))
            if _footprint_bytes(tm, tk_c, cout_p, cin_p // tk_c, 1,
                                dbytes) <= budget:
                tk, tn = tk_c, cout_p             # K tiled only
                break
            tn_c = _pick_tile(cout_p, (1024, 512, 256, 128))
            if _footprint_bytes(tm, tk_c, tn_c, cin_p // tk_c,
                                cout_p // tn_c, dbytes) <= budget:
                tk, tn = tk_c, tn_c               # K and N tiled
                break
            if tm > sub:
                tm = max(sub, tm // 2)
                continue
            tk, tn = tk_c, tn_c                   # smallest tiles; best effort
            break

    n_k = cin_p // tk
    n_n = cout_p // tn

    # ---- fuse + pad parameters ONCE (hoisted out of the per-call path) ----
    def _pad_w(w):
        return jnp.pad(w, ((0, cin_p - cin), (0, cout_p - cout)))

    def _pad_b(b):
        return jnp.pad(b, (0, cout_p - cout))

    # Per-N-tile interleaved layout: column tile j holds [Wl_j | Wr_j] so the
    # left/right split inside the kernel is a static 128-aligned lane slice.
    wl = _pad_w(w_left).reshape(cin_p, n_n, tn)
    wr = _pad_w(w_right).reshape(cin_p, n_n, tn)
    w_fused = jnp.stack([wl, wr], axis=2).reshape(cin_p, n_n * 2 * tn)
    w_fused = w_fused.astype(compute_dtype)
    bl = _pad_b(b_left).reshape(n_n, tn)
    br = _pad_b(b_right).reshape(n_n, tn)
    b_fused = jnp.stack([bl, br], axis=1).reshape(1, n_n * 2 * tn)
    b_fused = b_fused.astype(param_dtype)

    def glu(x):
        *lead, cin_in = x.shape
        assert cin_in == cin, (cin_in, cin)
        out_dtype = x.dtype

        m = 1
        for d in lead:
            m *= d
        m = max(m, 1)

        tm_call = _round_up(min(tm, _round_up(m, sub)), sub)
        m_p = _round_up(m, tm_call)

        x2d = x.reshape(m, cin_in)
        if m_p != m or cin_p != cin_in:
            x2d = jnp.pad(x2d, ((0, m_p - m), (0, cin_p - cin_in)))
        if x2d.dtype != compute_dtype:
            x2d = x2d.astype(compute_dtype)

        vmem_limit = int(min(
            max(_footprint_bytes(tm_call, tk, tn, n_k, n_n, dbytes) + (8 << 20),
                32 << 20),
            budget))

        w_streams = 1 if n_k == 1 else (m_p // tm_call)
        cost = pl.CostEstimate(
            flops=2 * m_p * cin_p * 2 * cout_p,
            bytes_accessed=(m_p * cin_p * dbytes
                            + w_streams * cin_p * 2 * cout_p * dbytes
                            + m_p * cout_p * jnp.dtype(out_dtype).itemsize),
            transcendentals=m_p * cout_p)

        def _build_specs(allow_single_buffer):
            def _spec(shape, index_map, constant):
                if allow_single_buffer and constant and hasattr(pl, "Buffered"):
                    return pl.BlockSpec(shape, index_map,
                                        pipeline_mode=pl.Buffered(1))
                return pl.BlockSpec(shape, index_map)

            if n_k == 1:
                in_specs = [
                    pl.BlockSpec((tm_call, cin_p), lambda i, j: (i, 0)),
                    _spec((cin_p, 2 * tn), lambda i, j: (0, j), n_n == 1),
                    _spec((1, 2 * tn), lambda i, j: (0, j), n_n == 1),
                ]
                out_spec = pl.BlockSpec((tm_call, tn), lambda i, j: (i, j))
            else:
                in_specs = [
                    pl.BlockSpec((tm_call, tk), lambda i, j, k: (i, k)),
                    _spec((tk, 2 * tn), lambda i, j, k: (k, j), False),
                    _spec((1, 2 * tn), lambda i, j, k: (0, j), n_n == 1),
                ]
                out_spec = pl.BlockSpec((tm_call, tn), lambda i, j, k: (i, j))
            return in_specs, out_spec

        def _run(allow_single_buffer):
            in_specs, out_spec = _build_specs(allow_single_buffer)
            if n_k == 1:
                kernel = functools.partial(_glu_kernel_noacc, tn=tn)
                grid = (m_p // tm_call, n_n)
                scratch = []
                dims = ("parallel", "parallel")
            else:
                kernel = functools.partial(_glu_kernel_acc, tn=tn)
                grid = (m_p // tm_call, n_n, n_k)
                scratch = [pltpu.VMEM((tm_call, 2 * tn), jnp.float32)]
                dims = ("parallel", "parallel", "arbitrary")
            return pl.pallas_call(
                kernel,
                out_shape=jax.ShapeDtypeStruct((m_p, cout_p), out_dtype),
                grid_spec=pltpu.PrefetchScalarGridSpec(
                    num_scalar_prefetch=0,
                    grid=grid,
                    in_specs=in_specs,
                    out_specs=out_spec,
                    scratch_shapes=scratch),
                compiler_params=pltpu.CompilerParams(
                    dimension_semantics=dims,
                    vmem_limit_bytes=vmem_limit),
                cost_estimate=cost,
            )(x2d, w_fused, b_fused)

        try:
            out = _run(True)          # single-buffer resident weight/bias
        except Exception:
            out = _run(False)         # fall back to default double buffering

        return out[:m, :cout].reshape(*lead, cout)

    return glu


def glu_pallas(x, w_left, b_left, w_right, b_right, **kwargs):
    """One-shot convenience wrapper (for repeated calls prefer make_glu)."""
    return make_glu(w_left, b_left, w_right, b_right, **kwargs)(x)


def init_glu_params(key, input_channel, output_channel, dtype=jnp.float32):
    """Mirror nn.Linear default init (uniform(-1/sqrt(in), 1/sqrt(in)))."""
    k1, k2, k3, k4 = jax.random.split(key, 4)
    bound = 1.0 / math.sqrt(input_channel)
    # stored as (Cin, Cout), i.e. transpose of PyTorch's (Cout, Cin)
    w_left = jax.random.uniform(k1, (input_channel, output_channel), dtype,
                                minval=-bound, maxval=bound)
    b_left = jax.random.uniform(k2, (output_channel,), dtype,
                                minval=-bound, maxval=bound)
    w_right = jax.random.uniform(k3, (input_channel, output_channel), dtype,
                                 minval=-bound, maxval=bound)
    b_right = jax.random.uniform(k4, (output_channel,), dtype,
                                 minval=-bound, maxval=bound)
    return w_left, b_left, w_right, b_right


if __name__ == "__main__":
    key = jax.random.PRNGKey(0)
    kx1, kp1, kx2, kp2 = jax.random.split(key, 4)
    hi = jax.lax.Precision.HIGHEST

    # --- case 1: small shapes, resident-weight no-scratch fast path ---------
    batch, seq = 2, 8
    cin, cout = 32, 32
    x = jax.random.normal(kx1, (batch, seq, cin), dtype=jnp.float32)
    wl, bl, wr, br = init_glu_params(kp1, cin, cout)
    glu = make_glu(wl, bl, wr, br)            # fuse/pad hoisted out of the call
    out = jax.block_until_ready(glu(x))
    ref = (jnp.matmul(x, wl, precision=hi) + bl) * jax.nn.sigmoid(
        jnp.matmul(x, wr, precision=hi) + br)
    assert out.shape == (batch, seq, cout)
    err = float(jnp.max(jnp.abs(out - ref)))
    assert jnp.allclose(out, ref, atol=1e-4, rtol=1e-4), err

    # --- case 2: forced K/N tiling to exercise the accumulator path ---------
    cin2, cout2 = 256, 256
    x2 = jax.random.normal(kx2, (batch, seq, cin2), dtype=jnp.float32)
    wl2, bl2, wr2, br2 = init_glu_params(kp2, cin2, cout2)
    glu2 = make_glu(wl2, bl2, wr2, br2, force_tk=128, force_tn=128)
    out2 = jax.block_until_ready(glu2(x2))
    ref2 = (jnp.matmul(x2, wl2, precision=hi) + bl2) * jax.nn.sigmoid(
        jnp.matmul(x2, wr2, precision=hi) + br2)
    err2 = float(jnp.max(jnp.abs(out2 - ref2)))
    assert out2.shape == (batch, seq, cout2)
    assert jnp.allclose(out2, ref2, atol=2e-4, rtol=2e-4), err2

    print("KERNEL_OK")
</pallas_src>

<mosaic_0001>
module attributes {stable_mosaic.version = 11 : i64} {
  func.func @_glu_kernel_noacc(%arg0: i32, %arg1: i32, %arg2: memref<16x128xf32, #tpu.memory_space<vmem>>, %arg3: memref<128x256xf32, #tpu.memory_space<vmem>>, %arg4: memref<1x256xf32, #tpu.memory_space<vmem>>, %arg5: memref<16x128xf32, #tpu.memory_space<vmem>>) attributes {dimension_semantics = [#tpu.dimension_semantics<parallel>, #tpu.dimension_semantics<parallel>], iteration_bounds = array<i64: 1, 1>, scalar_prefetch = 0 : i64, scratch_operands = 0 : i64, tpu.core_type = #tpu.core_type<tc>, window_params = [{transform_indices = @transform_0, window_bounds = array<i64: 16, 128>}, {pipeline_mode = #tpu.pipeline_mode<synchronous>, transform_indices = @transform_1, window_bounds = array<i64: 128, 256>}, {pipeline_mode = #tpu.pipeline_mode<synchronous>, transform_indices = @transform_2, window_bounds = array<i64: 1, 256>}, {transform_indices = @transform_3, window_bounds = array<i64: 16, 128>}]} {
    %c0 = arith.constant 0 : index
    %c0_0 = arith.constant 0 : index
    %0 = vector.load %arg2[%c0, %c0_0] : memref<16x128xf32, #tpu.memory_space<vmem>>, vector<16x128xf32>
    %c0_1 = arith.constant 0 : index
    %c0_2 = arith.constant 0 : index
    %1 = vector.load %arg3[%c0_1, %c0_2] : memref<128x256xf32, #tpu.memory_space<vmem>>, vector<128x256xf32>
    %cst = arith.constant dense<0.000000e+00> : vector<16x256xf32>
    %2 = tpu.matmul %0, %1, %cst {dimension_numbers = #tpu.dot_dimension_numbers<[1], [0], [0], [1], [0, 0, 1, 1], [], []>} : vector<16x128xf32>, vector<128x256xf32>, vector<16x256xf32> -> vector<16x256xf32>
    %c0_3 = arith.constant 0 : index
    %c0_4 = arith.constant 0 : index
    %3 = vector.load %arg4[%c0_3, %c0_4] : memref<1x256xf32, #tpu.memory_space<vmem>>, vector<1x256xf32>
    %4 = vector.broadcast %3 : vector<1x256xf32> to vector<16x256xf32>
    %5 = arith.addf %2, %4 : vector<16x256xf32>
    %6 = vector.extract_strided_slice %5 {offsets = [0, 0], sizes = [16, 128], strides = [1, 1]} : vector<16x256xf32> to vector<16x128xf32>
    %7 = vector.extract_strided_slice %5 {offsets = [0, 128], sizes = [16, 128], strides = [1, 1]} : vector<16x256xf32> to vector<16x128xf32>
    %8 = arith.negf %7 : vector<16x128xf32>
    %9 = math.exp %8 : vector<16x128xf32>
    %cst_5 = arith.constant 1.000000e+00 : f32
    %10 = vector.broadcast %cst_5 : f32 to vector<16x128xf32>
    %11 = arith.addf %10, %9 : vector<16x128xf32>
    %12 = arith.divf %10, %11 : vector<16x128xf32>
    %13 = arith.mulf %6, %12 : vector<16x128xf32>
    %c0_6 = arith.constant 0 : index
    %c0_7 = arith.constant 0 : index
    %14 = vector.load %arg5[%c0_6, %c0_7] : memref<16x128xf32, #tpu.memory_space<vmem>>, vector<16x128xf32>
    tpu.vector_store %arg5[%c0_6, %c0_7], %13 {strides = array<i32>} : memref<16x128xf32, #tpu.memory_space<vmem>>, vector<16x128xf32>,
    return
  }
  func.func @transform_0(%arg0: i32, %arg1: i32) -> (i32, i32) {
    %c0_i32 = arith.constant 0 : i32
    %c0_i32_0 = arith.constant 0 : i32
    return %arg0, %c0_i32 : i32, i32
  }
  func.func @transform_1(%arg0: i32, %arg1: i32) -> (i32, i32) {
    %c0_i32 = arith.constant 0 : i32
    %c0_i32_0 = arith.constant 0 : i32
    return %c0_i32, %arg1 : i32, i32
  }
  func.func @transform_2(%arg0: i32, %arg1: i32) -> (i32, i32) {
    %c0_i32 = arith.constant 0 : i32
    %c0_i32_0 = arith.constant 0 : i32
    return %c0_i32, %arg1 : i32, i32
  }
  func.func @transform_3(%arg0: i32, %arg1: i32) -> (i32, i32) {
    %c0_i32 = arith.constant 0 : i32
    return %arg0, %arg1 : i32, i32
  }
}

module attributes {stable_mosaic.version = 11 : i64} {
  func.func @_glu_kernel_noacc(%arg0: i32, %arg1: i32, %arg2: memref<16x128xf32, #tpu.memory_space<vmem>>, %arg3: memref<128x256xf32, #tpu.memory_space<vmem>>, %arg4: memref<1x256xf32, #tpu.memory_space<vmem>>, %arg5: memref<16x128xf32, #tpu.memory_space<vmem>>) attributes {dimension_semantics = [#tpu.dimension_semantics<parallel>, #tpu.dimension_semantics<parallel>], iteration_bounds = array<i64: 1, 1>, scalar_prefetch = 0 : i64, scratch_operands = 0 : i64, tpu.core_type = #tpu.core_type<tc>, window_params = [{transform_indices = @transform_0, window_bounds = array<i64: 16, 128>}, {transform_indices = @transform_1, window_bounds = array<i64: 128, 256>}, {transform_indices = @transform_2, window_bounds = array<i64: 1, 256>}, {transform_indices = @transform_3, window_bounds = array<i64: 16, 128>}]} {
    %c0 = arith.constant 0 : index
    %c0_0 = arith.constant 0 : index
    %0 = vector.load %arg2[%c0, %c0_0] : memref<16x128xf32, #tpu.memory_space<vmem>>, vector<16x128xf32>
    %c0_1 = arith.constant 0 : index
    %c0_2 = arith.constant 0 : index
    %1 = vector.load %arg3[%c0_1, %c0_2] : memref<128x256xf32, #tpu.memory_space<vmem>>, vector<128x256xf32>
    %cst = arith.constant dense<0.000000e+00> : vector<16x256xf32>
    %2 = tpu.matmul %0, %1, %cst {dimension_numbers = #tpu.dot_dimension_numbers<[1], [0], [0], [1], [0, 0, 1, 1], [], []>} : vector<16x128xf32>, vector<128x256xf32>, vector<16x256xf32> -> vector<16x256xf32>
    %c0_3 = arith.constant 0 : index
    %c0_4 = arith.constant 0 : index
    %3 = vector.load %arg4[%c0_3, %c0_4] : memref<1x256xf32, #tpu.memory_space<vmem>>, vector<1x256xf32>
    %4 = vector.broadcast %3 : vector<1x256xf32> to vector<16x256xf32>
    %5 = arith.addf %2, %4 : vector<16x256xf32>
    %6 = vector.extract_strided_slice %5 {offsets = [0, 0], sizes = [16, 128], strides = [1, 1]} : vector<16x256xf32> to vector<16x128xf32>
    %7 = vector.extract_strided_slice %5 {offsets = [0, 128], sizes = [16, 128], strides = [1, 1]} : vector<16x256xf32> to vector<16x128xf32>
    %8 = arith.negf %7 : vector<16x128xf32>
    %9 = math.exp %8 : vector<16x128xf32>
    %cst_5 = arith.constant 1.000000e+00 : f32
    %10 = vector.broadcast %cst_5 : f32 to vector<16x128xf32>
    %11 = arith.addf %10, %9 : vector<16x128xf32>
    %12 = arith.divf %10, %11 : vector<16x128xf32>
    %13 = arith.mulf %6, %12 : vector<16x128xf32>
    %c0_6 = arith.constant 0 : index
    %c0_7 = arith.constant 0 : index
    %14 = vector.load %arg5[%c0_6, %c0_7] : memref<16x128xf32, #tpu.memory_space<vmem>>, vector<16x128xf32>
    tpu.vector_store %arg5[%c0_6, %c0_7], %13 {strides = array<i32>} : memref<16x128xf32, #tpu.memory_space<vmem>>, vector<16x128xf32>,
    return
  }
  func.func @transform_0(%arg0: i32, %arg1: i32) -> (i32, i32) {
    %c0_i32 = arith.constant 0 : i32
    %c0_i32_0 = arith.constant 0 : i32
    return %arg0, %c0_i32 : i32, i32
  }
  func.func @transform_1(%arg0: i32, %arg1: i32) -> (i32, i32) {
    %c0_i32 = arith.constant 0 : i32
    %c0_i32_0 = arith.constant 0 : i32
    return %c0_i32, %arg1 : i32, i32
  }
  func.func @transform_2(%arg0: i32, %arg1: i32) -> (i32, i32) {
    %c0_i32 = arith.constant 0 : i32
    %c0_i32_0 = arith.constant 0 : i32
    return %c0_i32, %arg1 : i32, i32
  }
  func.func @transform_3(%arg0: i32, %arg1: i32) -> (i32, i32) {
    %c0_i32 = arith.constant 0 : i32
    return %arg0, %arg1 : i32, i32
  }
}

</mosaic_0001>

<llo_original>
// kernel: tpu_custom_call.1
$region0: #{tpu_custom_call.1}
  #allocation0 [shape = 'u32[]', space=smem, size = 0x4, offset = 0x4, fixed_abs, tag = 'smem constant byte address 0x4 - core index']
  #allocation1 [shape = 'u32[144,128]{1,0:T(1,128)}', space=vmem, size = 0x12000, scoped, tag = 'internal scratch']
  %s0 = inlined_call_operand.hbm [shape: f32[16,128], index: 0, kind: input, shape index: {}]
  %s1 = inlined_call_operand.hbm [shape: f32[128,256], index: 1, kind: input, shape index: {}]
  %s2 = inlined_call_operand.vmem [shape: f32[1,256], index: 2, kind: input, shape index: {}]
  %s3 = inlined_call_operand.hbm [shape: f32[16,128], index: 3, kind: output, shape index: {}]
  %s4 = sld [smem:[#allocation0]]
  $region30: #{tpu_custom_call.1} parent=0
    _
  %s6 = ssub.s32 1, %s4
  %s7 = scalar_select 0, %s6, %s4
  $region1: #{tpu_custom_call.1} parent=0
    #allocation2 [shape = 'u8[8192]{0}', space=vmem, size = 0x2000, scoped, tag = 'input window, operand 0, single buffered']
    #allocation3 [shape = 's32[1]{0}', space=sflag, size = 0x4, scoped, tag = 'scoped memory for tpu_custom_call.1']
    #allocation4 [shape = 's32[1]{0}', space=sflag, size = 0x4, scoped, tag = 'scoped memory for tpu_custom_call.1']
    #allocation5 [shape = 'u8[131072]{0}', space=vmem, size = 0x20000, scoped, tag = 'input window, operand 1, single buffered']
    #allocation6 [shape = 's32[1]{0}', space=sflag, size = 0x4, scoped, tag = 'scoped memory for tpu_custom_call.1']
    #allocation7 [shape = 'u8[8192]{0}', space=vmem, size = 0x2000, scoped, tag = 'output window, operand 0, single buffered']
    %8 = vsyncpa [#allocation3], 0
    %9 = vsyncpa [#allocation6], 0
    %10 = vsyncpa [#allocation4], 0
    // Predicated region
    $region2: #{tpu_custom_call.1} parent=1 // pred_check
      _
    $region3: #{tpu_custom_call.1} parent=1 // pred_check_branch
      %12 = sbr.rel (0) target = $region5
    $region4: #{tpu_custom_call.1} parent=1 // pred_region
      %s14 = ssub.s32 256, 256
      %15 = vsyncadd [#allocation3], %s14
      %s16 = sshll.u32 [#allocation2], 4
      %s17 = int_to_ptr.vmem [resolvable:$true] %s16
      %22 = dma.hbm_to_vmem [thread:$0]  %s0, 256, %s17, [#allocation3], 128, 128, 8
    $region5: #{tpu_custom_call.1} parent=1 // pred_fallthru
      _
    // Predicated region
    $region6: #{tpu_custom_call.1} parent=1 // pred_check
      _
    $region7: #{tpu_custom_call.1} parent=1 // pred_check_branch
      %24 = sbr.rel (0) target = $region9
    $region8: #{tpu_custom_call.1} parent=1 // pred_region
      %s26 = ssub.s32 4096, 4096
      %27 = vsyncadd [#allocation6], %s26
      %s28 = sshll.u32 [#allocation5], 4
      %s29 = int_to_ptr.vmem [resolvable:$true] %s28
      %34 = dma.hbm_to_vmem [thread:$0]  %s1, 4096, %s29, [#allocation6], 256, 256, 16
    $region9: #{tpu_custom_call.1} parent=1 // pred_fallthru
      _
    // Predicated region
    $region10: #{tpu_custom_call.1} parent=1 // pred_check
      _
    $region11: #{tpu_custom_call.1} parent=1 // pred_check_branch
      %36 = sbr.rel (0) target = $region13
    $region12: #{tpu_custom_call.1} parent=1 // pred_region
      _
    $region13: #{tpu_custom_call.1} parent=1 // pred_fallthru
      _
    // Predicated region
    $region14: #{tpu_custom_call.1} parent=1 // pred_check
      _
    $region15: #{tpu_custom_call.1} parent=1 // pred_check_branch
      %38 = sbr.rel (0) target = $region17
    $region16: #{tpu_custom_call.1} parent=1 // pred_region
      %39 = dma.done [#allocation3], 256
    $region17: #{tpu_custom_call.1} parent=1 // pred_fallthru
      _
    // Predicated region
    $region18: #{tpu_custom_call.1} parent=1 // pred_check
      _
    $region19: #{tpu_custom_call.1} parent=1 // pred_check_branch
      %41 = sbr.rel (0) target = $region21
    $region20: #{tpu_custom_call.1} parent=1 // pred_region
      %42 = dma.done [#allocation6], 4096
    $region21: #{tpu_custom_call.1} parent=1 // pred_fallthru
      _
    %v43 = vld [vmem:[#allocation2] sm:$0xff]
    %v44 = vld [vmem:[#allocation2 + $0x8] sm:$0xff]
    %v45 = vld [vmem:[#allocation5] sm:$0xff]
    %v46 = vld [vmem:[#allocation5 + $0x8] sm:$0xff]
    %v47 = vld [vmem:[#allocation5 + $0x10] sm:$0xff]
    %v48 = vld [vmem:[#allocation5 + $0x18] sm:$0xff]
    %v49 = vld [vmem:[#allocation5 + $0x20] sm:$0xff]
    %v50 = vld [vmem:[#allocation5 + $0x28] sm:$0xff]
    %v51 = vld [vmem:[#allocation5 + $0x30] sm:$0xff]
    %v52 = vld [vmem:[#allocation5 + $0x38] sm:$0xff]
    %v53 = vld [vmem:[#allocation5 + $0x40] sm:$0xff]
    %v54 = vld [vmem:[#allocation5 + $0x48] sm:$0xff]
    %v55 = vld [vmem:[#allocation5 + $0x50] sm:$0xff]
    %v56 = vld [vmem:[#allocation5 + $0x58] sm:$0xff]
    %v57 = vld [vmem:[#allocation5 + $0x60] sm:$0xff]
    %v58 = vld [vmem:[#allocation5 + $0x68] sm:$0xff]
    %v59 = vld [vmem:[#allocation5 + $0x70] sm:$0xff]
    %v60 = vld [vmem:[#allocation5 + $0x78] sm:$0xff]
    %v61 = vld [vmem:[#allocation5 + $0x80] sm:$0xff]
    %v62 = vld [vmem:[#allocation5 + $0x88] sm:$0xff]
    %v63 = vld [vmem:[#allocation5 + $0x90] sm:$0xff]
    %v64 = vld [vmem:[#allocation5 + $0x98] sm:$0xff]
    %v65 = vld [vmem:[#allocation5 + $0xa0] sm:$0xff]
    %v66 = vld [vmem:[#allocation5 + $0xa8] sm:$0xff]
    %v67 = vld [vmem:[#allocation5 + $0xb0] sm:$0xff]
    %v68 = vld [vmem:[#allocation5 + $0xb8] sm:$0xff]
    %v69 = vld [vmem:[#allocation5 + $0xc0] sm:$0xff]
    %v70 = vld [vmem:[#allocation5 + $0xc8] sm:$0xff]
    %v71 = vld [vmem:[#allocation5 + $0xd0] sm:$0xff]
    %v72 = vld [vmem:[#allocation5 + $0xd8] sm:$0xff]
    %v73 = vld [vmem:[#allocation5 + $0xe0] sm:$0xff]
    %v74 = vld [vmem:[#allocation5 + $0xe8] sm:$0xff]
    %v75 = vld [vmem:[#allocation5 + $0xf0] sm:$0xff]
    %v76 = vld [vmem:[#allocation5 + $0xf8] sm:$0xff]
    %v77 = vld [vmem:[%s2] sm:$0x3]
    %v79 = vlaneseq
    %v80 = vshrl.u32 %v79, 7
    %v81 = vsub.s32 0, %v80
    %v82 = vrot.slane %v77, %v81
    %v83 = vlaneseq
    %v84 = vshrl.u32 %v83, 7
    %v85 = vsub.s32 1, %v84
    %v86 = vrot.slane %v77, %v85
    %89 = vmatprep.subr.mxu0 %v76
    %90 = vmatpush1.msra.mxu0 %v75
    %91 = vmatprep.subr.mxu0 %v74
    %92 = vmatpush1.msra.mxu0 %v73
    %93 = vmatprep.subr.mxu0 %v72
    %94 = vmatpush1.msra.mxu0 %v71
    %95 = vmatprep.subr.mxu0 %v70
    %96 = vmatpush1.msra.mxu0 %v69
    %97 = vmatprep.subr.mxu0 %v68
    %98 = vmatpush1.msra.mxu0 %v67
    %99 = vmatprep.subr.mxu0 %v66
    %100 = vmatpush1.msra.mxu0 %v65
    %101 = vmatprep.subr.mxu0 %v64
    %102 = vmatpush1.msra.mxu0 %v63
    %103 = vmatprep.subr.mxu0 %v62
    %104 = vmatpush1.msra.mxu0 %v61
    %105 = vmatprep.subr.mxu0 %v60
    %106 = vmatpush1.msra.mxu0 %v59
    %107 = vmatprep.subr.mxu0 %v58
    %108 = vmatpush1.msra.mxu0 %v57
    %109 = vmatprep.subr.mxu0 %v56
    %110 = vmatpush1.msra.mxu0 %v55
    %111 = vmatprep.subr.mxu0 %v54
    %112 = vmatpush1.msra.mxu0 %v53
    %113 = vmatprep.subr.mxu0 %v52
    %114 = vmatpush1.msra.mxu0 %v51
    %115 = vmatprep.subr.mxu0 %v50
    %116 = vmatpush1.msra.mxu0 %v49
    %117 = vmatprep.subr.mxu0 %v48
    %118 = vmatpush1.msra.mxu0 %v47
    %119 = vmatprep.subr.mxu0 %v46
    %120 = vmatpush1.msra.mxu0 %v45
    %121 = vmatprep.subr.mxu0 0.0
    %122 = vmatpush2.msra.mxu0 0.0
    %123 = vmatprep.subr.mxu0 0.0
    %124 = vmatpush2.msra.mxu0 0.0
    %125 = vmatprep.subr.mxu0 0.0
    %126 = vmatpush2.msra.mxu0 0.0
    %127 = vmatprep.subr.mxu0 0.0
    %128 = vmatpush2.msra.mxu0 0.0
    %129 = vmatprep.subr.mxu0 0.0
    %130 = vmatpush2.msra.mxu0 0.0
    %131 = vmatprep.subr.mxu0 0.0
    %132 = vmatpush2.msra.mxu0 0.0
    %133 = vmatprep.subr.mxu0 0.0
    %134 = vmatpush2.msra.mxu0 0.0
    %135 = vmatprep.subr.mxu0 0.0
    %136 = vmatpush2.msra.mxu0 0.0
    %137 = vmatprep.subr.mxu0 0.0
    %138 = vmatpush2.msra.mxu0 0.0
    %139 = vmatprep.subr.mxu0 0.0
    %140 = vmatpush2.msra.mxu0 0.0
    %141 = vmatprep.subr.mxu0 0.0
    %142 = vmatpush2.msra.mxu0 0.0
    %143 = vmatprep.subr.mxu0 0.0
    %144 = vmatpush2.msra.mxu0 0.0
    %145 = vmatprep.subr.mxu0 0.0
    %146 = vmatpush2.msra.mxu0 0.0
    %147 = vmatprep.subr.mxu0 0.0
    %148 = vmatpush2.msra.mxu0 0.0
    %149 = vmatprep.subr.mxu0 0.0
    %150 = vmatpush2.msra.mxu0 0.0
    %151 = vmatprep.subr.mxu0 0.0
    %152 = vmatpush2.msra.mxu0 0.0
    %153 = vmatprep.mubr.f32.mxu0 0.0
    %154 = vmatmul.mubr.f32.gmra.mxu0 %v43
    %v155 = vpop.f32.mrf.mxu0
    %v156 = vadd.f32 %v82, %v155
    %v157 = vpop.f32.mrf.mxu0
    %v158 = vadd.f32 %v86, %v157
    %159 = vmatprep.mubr.f32.mxu0 0.0
    %160 = vmatmul.mubr.f32.gmra.mxu0 %v44
    %v161 = vpop.f32.mrf.mxu0
    %v162 = vadd.f32 %v82, %v161
    %v163 = vpop.f32.mrf.mxu0
    %v164 = vadd.f32 %v86, %v163
    %165 = vdwg.mxu0
    %v166 = vxor.u32 %v158, 2147483648
    %v167 = vxor.u32 %v164, 2147483648
    %v168 = vmul.f32 %v166, 1.442695
    %v169 = vpow.pop %v168
    %v170 = vmul.f32 %v167, 1.442695
    %v171 = vpow.pop %v170
    %v172 = vadd.f32 %v169, 1.0
    %v173 = vadd.f32 %v171, 1.0
    %v174 = vrcp.pop %v172
    %v175 = vmul.f32 1.0, %v174
    %v176 = vrcp.pop %v173
    %v177 = vmul.f32 1.0, %v176
    %v178 = vmul.f32 %v156, %v175
    %v179 = vmul.f32 %v162, %v177
    %180 = vst [vmem:[#allocation7] sm:$0xff] %v178
    %181 = vst [vmem:[#allocation7 + $0x8] sm:$0xff] %v179
    // Predicated region
    $region22: #{tpu_custom_call.1} parent=1 // pred_check
      _
    $region23: #{tpu_custom_call.1} parent=1 // pred_check_branch
      %183 = sbr.rel (0) target = $region25
    $region24: #{tpu_custom_call.1} parent=1 // pred_region
      %s185 = ssub.s32 256, 256
      %186 = vsyncadd [#allocation4], %s185
      %s187 = sshll.u32 [#allocation7], 4
      %s188 = int_to_ptr.vmem [resolvable:$true] %s187
      %193 = dma.vmem_to_hbm [thread:$0]  %s188, 256, %s3, [#allocation4], 128, 128, 8
    $region25: #{tpu_custom_call.1} parent=1 // pred_fallthru
      _
    // Predicated region
    $region26: #{tpu_custom_call.1} parent=1 // pred_check
      _
    $region27: #{tpu_custom_call.1} parent=1 // pred_check_branch
      %195 = sbr.rel (0) target = $region29
    $region28: #{tpu_custom_call.1} parent=1 // pred_region
      %196 = dma.done [#allocation4], 256
    $region29: #{tpu_custom_call.1} parent=1 // pred_fallthru
      _
    %197 = vsyncpa [#allocation3], 1
    %198 = vsyncpa [#allocation6], 1
    %199 = vsyncpa [#allocation4], 1

// kernel: tpu_custom_call.1
$region0: #{tpu_custom_call.1}
  #allocation0 [shape = 'u32[]', space=smem, size = 0x4, offset = 0x4, fixed_abs, tag = 'smem constant byte address 0x4 - core index']
  #allocation1 [shape = 'u32[144,128]{1,0:T(1,128)}', space=vmem, size = 0x12000, scoped, tag = 'internal scratch']
  %s0 = inlined_call_operand.hbm [shape: f32[16,128], index: 0, kind: input, shape index: {}]
  %s1 = inlined_call_operand.hbm [shape: f32[128,256], index: 1, kind: input, shape index: {}]
  %s2 = inlined_call_operand.vmem [shape: f32[1,256], index: 2, kind: input, shape index: {}]
  %s3 = inlined_call_operand.hbm [shape: f32[16,128], index: 3, kind: output, shape index: {}]
  %s4 = sld [smem:[#allocation0]]
  $region30: #{tpu_custom_call.1} parent=0
    _
  %s6 = ssub.s32 1, %s4
  %s7 = scalar_select 0, %s6, %s4
  $region1: #{tpu_custom_call.1} parent=0
    #allocation2 [shape = 'u8[8192]{0}', space=vmem, size = 0x2000, scoped, tag = 'input window, operand 0, single buffered']
    #allocation3 [shape = 's32[1]{0}', space=sflag, size = 0x4, scoped, tag = 'scoped memory for tpu_custom_call.1']
    #allocation4 [shape = 's32[1]{0}', space=sflag, size = 0x4, scoped, tag = 'scoped memory for tpu_custom_call.1']
    #allocation5 [shape = 'u8[131072]{0}', space=vmem, size = 0x20000, scoped, tag = 'input window, operand 1, single buffered']
    #allocation6 [shape = 's32[1]{0}', space=sflag, size = 0x4, scoped, tag = 'scoped memory for tpu_custom_call.1']
    #allocation7 [shape = 'u8[8192]{0}', space=vmem, size = 0x2000, scoped, tag = 'output window, operand 0, single buffered']
    %8 = vsyncpa [#allocation3], 0
    %9 = vsyncpa [#allocation6], 0
    %10 = vsyncpa [#allocation4], 0
    // Predicated region
    $region2: #{tpu_custom_call.1} parent=1 // pred_check
      _
    $region3: #{tpu_custom_call.1} parent=1 // pred_check_branch
      %12 = sbr.rel (0) target = $region5
    $region4: #{tpu_custom_call.1} parent=1 // pred_region
      %s14 = ssub.s32 256, 256
      %15 = vsyncadd [#allocation3], %s14
      %s16 = sshll.u32 [#allocation2], 4
      %s17 = int_to_ptr.vmem [resolvable:$true] %s16
      %22 = dma.hbm_to_vmem [thread:$0]  %s0, 256, %s17, [#allocation3], 128, 128, 8
    $region5: #{tpu_custom_call.1} parent=1 // pred_fallthru
      _
    // Predicated region
    $region6: #{tpu_custom_call.1} parent=1 // pred_check
      _
    $region7: #{tpu_custom_call.1} parent=1 // pred_check_branch
      %24 = sbr.rel (0) target = $region9
    $region8: #{tpu_custom_call.1} parent=1 // pred_region
      %s26 = ssub.s32 4096, 4096
      %27 = vsyncadd [#allocation6], %s26
      %s28 = sshll.u32 [#allocation5], 4
      %s29 = int_to_ptr.vmem [resolvable:$true] %s28
      %34 = dma.hbm_to_vmem [thread:$0]  %s1, 4096, %s29, [#allocation6], 256, 256, 16
    $region9: #{tpu_custom_call.1} parent=1 // pred_fallthru
      _
    // Predicated region
    $region10: #{tpu_custom_call.1} parent=1 // pred_check
      _
    $region11: #{tpu_custom_call.1} parent=1 // pred_check_branch
      %36 = sbr.rel (0) target = $region13
    $region12: #{tpu_custom_call.1} parent=1 // pred_region
      _
    $region13: #{tpu_custom_call.1} parent=1 // pred_fallthru
      _
    // Predicated region
    $region14: #{tpu_custom_call.1} parent=1 // pred_check
      _
    $region15: #{tpu_custom_call.1} parent=1 // pred_check_branch
      %38 = sbr.rel (0) target = $region17
    $region16: #{tpu_custom_call.1} parent=1 // pred_region
      %39 = dma.done [#allocation3], 256
    $region17: #{tpu_custom_call.1} parent=1 // pred_fallthru
      _
    // Predicated region
    $region18: #{tpu_custom_call.1} parent=1 // pred_check
      _
    $region19: #{tpu_custom_call.1} parent=1 // pred_check_branch
      %41 = sbr.rel (0) target = $region21
    $region20: #{tpu_custom_call.1} parent=1 // pred_region
      %42 = dma.done [#allocation6], 4096
    $region21: #{tpu_custom_call.1} parent=1 // pred_fallthru
      _
    %v43 = vld [vmem:[#allocation2] sm:$0xff]
    %v44 = vld [vmem:[#allocation2 + $0x8] sm:$0xff]
    %v45 = vld [vmem:[#allocation5] sm:$0xff]
    %v46 = vld [vmem:[#allocation5 + $0x8] sm:$0xff]
    %v47 = vld [vmem:[#allocation5 + $0x10] sm:$0xff]
    %v48 = vld [vmem:[#allocation5 + $0x18] sm:$0xff]
    %v49 = vld [vmem:[#allocation5 + $0x20] sm:$0xff]
    %v50 = vld [vmem:[#allocation5 + $0x28] sm:$0xff]
    %v51 = vld [vmem:[#allocation5 + $0x30] sm:$0xff]
    %v52 = vld [vmem:[#allocation5 + $0x38] sm:$0xff]
    %v53 = vld [vmem:[#allocation5 + $0x40] sm:$0xff]
    %v54 = vld [vmem:[#allocation5 + $0x48] sm:$0xff]
    %v55 = vld [vmem:[#allocation5 + $0x50] sm:$0xff]
    %v56 = vld [vmem:[#allocation5 + $0x58] sm:$0xff]
    %v57 = vld [vmem:[#allocation5 + $0x60] sm:$0xff]
    %v58 = vld [vmem:[#allocation5 + $0x68] sm:$0xff]
    %v59 = vld [vmem:[#allocation5 + $0x70] sm:$0xff]
    %v60 = vld [vmem:[#allocation5 + $0x78] sm:$0xff]
    %v61 = vld [vmem:[#allocation5 + $0x80] sm:$0xff]
    %v62 = vld [vmem:[#allocation5 + $0x88] sm:$0xff]
    %v63 = vld [vmem:[#allocation5 + $0x90] sm:$0xff]
    %v64 = vld [vmem:[#allocation5 + $0x98] sm:$0xff]
    %v65 = vld [vmem:[#allocation5 + $0xa0] sm:$0xff]
    %v66 = vld [vmem:[#allocation5 + $0xa8] sm:$0xff]
    %v67 = vld [vmem:[#allocation5 + $0xb0] sm:$0xff]
    %v68 = vld [vmem:[#allocation5 + $0xb8] sm:$0xff]
    %v69 = vld [vmem:[#allocation5 + $0xc0] sm:$0xff]
    %v70 = vld [vmem:[#allocation5 + $0xc8] sm:$0xff]
    %v71 = vld [vmem:[#allocation5 + $0xd0] sm:$0xff]
    %v72 = vld [vmem:[#allocation5 + $0xd8] sm:$0xff]
    %v73 = vld [vmem:[#allocation5 + $0xe0] sm:$0xff]
    %v74 = vld [vmem:[#allocation5 + $0xe8] sm:$0xff]
    %v75 = vld [vmem:[#allocation5 + $0xf0] sm:$0xff]
    %v76 = vld [vmem:[#allocation5 + $0xf8] sm:$0xff]
    %v77 = vld [vmem:[%s2] sm:$0x3]
    %v79 = vlaneseq
    %v80 = vshrl.u32 %v79, 7
    %v81 = vsub.s32 0, %v80
    %v82 = vrot.slane %v77, %v81
    %v83 = vlaneseq
    %v84 = vshrl.u32 %v83, 7
    %v85 = vsub.s32 1, %v84
    %v86 = vrot.slane %v77, %v85
    %89 = vmatprep.subr.mxu0 %v76
    %90 = vmatpush1.msra.mxu0 %v75
    %91 = vmatprep.subr.mxu0 %v74
    %92 = vmatpush1.msra.mxu0 %v73
    %93 = vmatprep.subr.mxu0 %v72
    %94 = vmatpush1.msra.mxu0 %v71
    %95 = vmatprep.subr.mxu0 %v70
    %96 = vmatpush1.msra.mxu0 %v69
    %97 = vmatprep.subr.mxu0 %v68
    %98 = vmatpush1.msra.mxu0 %v67
    %99 = vmatprep.subr.mxu0 %v66
    %100 = vmatpush1.msra.mxu0 %v65
    %101 = vmatprep.subr.mxu0 %v64
    %102 = vmatpush1.msra.mxu0 %v63
    %103 = vmatprep.subr.mxu0 %v62
    %104 = vmatpush1.msra.mxu0 %v61
    %105 = vmatprep.subr.mxu0 %v60
    %106 = vmatpush1.msra.mxu0 %v59
    %107 = vmatprep.subr.mxu0 %v58
    %108 = vmatpush1.msra.mxu0 %v57
    %109 = vmatprep.subr.mxu0 %v56
    %110 = vmatpush1.msra.mxu0 %v55
    %111 = vmatprep.subr.mxu0 %v54
    %112 = vmatpush1.msra.mxu0 %v53
    %113 = vmatprep.subr.mxu0 %v52
    %114 = vmatpush1.msra.mxu0 %v51
    %115 = vmatprep.subr.mxu0 %v50
    %116 = vmatpush1.msra.mxu0 %v49
    %117 = vmatprep.subr.mxu0 %v48
    %118 = vmatpush1.msra.mxu0 %v47
    %119 = vmatprep.subr.mxu0 %v46
    %120 = vmatpush1.msra.mxu0 %v45
    %121 = vmatprep.subr.mxu0 0.0
    %122 = vmatpush2.msra.mxu0 0.0
    %123 = vmatprep.subr.mxu0 0.0
    %124 = vmatpush2.msra.mxu0 0.0
    %125 = vmatprep.subr.mxu0 0.0
    %126 = vmatpush2.msra.mxu0 0.0
    %127 = vmatprep.subr.mxu0 0.0
    %128 = vmatpush2.msra.mxu0 0.0
    %129 = vmatprep.subr.mxu0 0.0
    %130 = vmatpush2.msra.mxu0 0.0
    %131 = vmatprep.subr.mxu0 0.0
    %132 = vmatpush2.msra.mxu0 0.0
    %133 = vmatprep.subr.mxu0 0.0
    %134 = vmatpush2.msra.mxu0 0.0
    %135 = vmatprep.subr.mxu0 0.0
    %136 = vmatpush2.msra.mxu0 0.0
    %137 = vmatprep.subr.mxu0 0.0
    %138 = vmatpush2.msra.mxu0 0.0
    %139 = vmatprep.subr.mxu0 0.0
    %140 = vmatpush2.msra.mxu0 0.0
    %141 = vmatprep.subr.mxu0 0.0
    %142 = vmatpush2.msra.mxu0 0.0
    %143 = vmatprep.subr.mxu0 0.0
    %144 = vmatpush2.msra.mxu0 0.0
    %145 = vmatprep.subr.mxu0 0.0
    %146 = vmatpush2.msra.mxu0 0.0
    %147 = vmatprep.subr.mxu0 0.0
    %148 = vmatpush2.msra.mxu0 0.0
    %149 = vmatprep.subr.mxu0 0.0
    %150 = vmatpush2.msra.mxu0 0.0
    %151 = vmatprep.subr.mxu0 0.0
    %152 = vmatpush2.msra.mxu0 0.0
    %153 = vmatprep.mubr.f32.mxu0 0.0
    %154 = vmatmul.mubr.f32.gmra.mxu0 %v43
    %v155 = vpop.f32.mrf.mxu0
    %v156 = vadd.f32 %v82, %v155
    %v157 = vpop.f32.mrf.mxu0
    %v158 = vadd.f32 %v86, %v157
    %159 = vmatprep.mubr.f32.mxu0 0.0
    %160 = vmatmul.mubr.f32.gmra.mxu0 %v44
    %v161 = vpop.f32.mrf.mxu0
    %v162 = vadd.f32 %v82, %v161
    %v163 = vpop.f32.mrf.mxu0
    %v164 = vadd.f32 %v86, %v163
    %165 = vdwg.mxu0
    %v166 = vxor.u32 %v158, 2147483648
    %v167 = vxor.u32 %v164, 2147483648
    %v168 = vmul.f32 %v166, 1.442695
    %v169 = vpow.pop %v168
    %v170 = vmul.f32 %v167, 1.442695
    %v171 = vpow.pop %v170
    %v172 = vadd.f32 %v169, 1.0
    %v173 = vadd.f32 %v171, 1.0
    %v174 = vrcp.pop %v172
    %v175 = vmul.f32 1.0, %v174
    %v176 = vrcp.pop %v173
    %v177 = vmul.f32 1.0, %v176
    %v178 = vmul.f32 %v156, %v175
    %v179 = vmul.f32 %v162, %v177
    %180 = vst [vmem:[#allocation7] sm:$0xff] %v178
    %181 = vst [vmem:[#allocation7 + $0x8] sm:$0xff] %v179
    // Predicated region
    $region22: #{tpu_custom_call.1} parent=1 // pred_check
      _
    $region23: #{tpu_custom_call.1} parent=1 // pred_check_branch
      %183 = sbr.rel (0) target = $region25
    $region24: #{tpu_custom_call.1} parent=1 // pred_region
      %s185 = ssub.s32 256, 256
      %186 = vsyncadd [#allocation4], %s185
      %s187 = sshll.u32 [#allocation7], 4
      %s188 = int_to_ptr.vmem [resolvable:$true] %s187
      %193 = dma.vmem_to_hbm [thread:$0]  %s188, 256, %s3, [#allocation4], 128, 128, 8
    $region25: #{tpu_custom_call.1} parent=1 // pred_fallthru
      _
    // Predicated region
    $region26: #{tpu_custom_call.1} parent=1 // pred_check
      _
    $region27: #{tpu_custom_call.1} parent=1 // pred_check_branch
      %195 = sbr.rel (0) target = $region29
    $region28: #{tpu_custom_call.1} parent=1 // pred_region
      %196 = dma.done [#allocation4], 256
    $region29: #{tpu_custom_call.1} parent=1 // pred_fallthru
      _
    %197 = vsyncpa [#allocation3], 1
    %198 = vsyncpa [#allocation6], 1
    %199 = vsyncpa [#allocation4], 1

</llo_original>
